<compile_context>
chip_gen: v7x
topology: tpu7x:2x2x1
jax: 0.10.0
libtpu: 0.0.40
codegen_flags: <defaults>
</compile_context>

<pallas_src>
import jax
import jax.numpy as jnp
import numpy as np
from jax.experimental import pallas as pl
from jax.experimental.pallas import tpu as pltpu


# ----------------------------- Pallas kernel --------------------------------
def discriminator_kernel(x_ref, w1_ref, b1_ref, w2_ref, b2_ref,
                         w3t_ref, b3_ref, o_ref):
    # Activation cast to bf16 in-kernel (MXU-native); weights arrive bf16.
    x = x_ref[...].astype(jnp.bfloat16)

    # Block 1: Linear(E, 512) + LeakyReLU(0.2)   (Dropout = eval identity)
    a1 = jnp.dot(x, w1_ref[...], preferred_element_type=jnp.float32) + b1_ref[...]
    h1 = jnp.maximum(a1, 0.2 * a1).astype(jnp.bfloat16)

    # Block 2: Linear(512, 256) + LeakyReLU(0.2) (Dropout = eval identity)
    a2 = jnp.dot(h1, w2_ref[...], preferred_element_type=jnp.float32) + b2_ref[...]
    h2 = jnp.maximum(a2, 0.2 * a2).astype(jnp.bfloat16)

    # Block 3: Linear(256, 1) + Sigmoid, computed transposed (NT matmul, same
    # form as q @ k^T in flash attention): (16, 256) x (tb, 256)^T -> (16, tb).
    # Only row 0 of w3t is real (rest zero-padded), so row 0 of h3t is the
    # logit row; the HBM store is one lane-dense (1, tb) row.
    h3t = jax.lax.dot_general(w3t_ref[...], h2, (((1,), (1,)), ((), ())),
                              preferred_element_type=jnp.float32)
    logit = h3t[0:1, :] + b3_ref[0, 0]
    o_ref[...] = jax.nn.sigmoid(logit).reshape(o_ref.shape)


# ------------------------------ tile picking ---------------------------------
def _round_up(x, m):
    return ((x + m - 1) // m) * m


def _pick_tile(batch, tb_max):
    """Batch tile: multiple of 128 (lane-aligned output row / full MXU M),
    capped at tb_max, and split so large batches get >= 2 grid steps (v7x)."""
    tb = _round_up(min(max(batch, 1), tb_max), 128)
    if batch > tb:
        return tb                                  # already >= 2 grid steps
    if batch >= 512:                               # split one big tile in two
        return _round_up((batch + 1) // 2, 128)
    return tb


# ------------------------------- wrapper -------------------------------------
def discriminator_forward(x, params, *, tb_max=1024):
    """x: [B, embedding_dim] f32 -> [B, 1] f32 (eval-mode forward)."""
    B, E = x.shape
    tb = _pick_tile(B, tb_max)
    Bp = pl.cdiv(B, tb) * tb
    if Bp != B:
        x = jnp.pad(x, ((0, Bp - B), (0, 0)))
    G = Bp // tb

    # Kernel-ready params (bf16 weights were cast once in init_params).
    w1, w2, w3t = params["w1_bf16"], params["w2_bf16"], params["w3t_bf16"]
    b1, b2, b3 = params["b1"], params["b2"], params["b3"]
    H1 = w1.shape[1]           # 512
    H2 = w2.shape[1]           # 256
    M3 = w3t.shape[0]          # 16 (sublane-padded transposed final layer)

    cp_kwargs = dict(dimension_semantics=("parallel",))
    if tb >= 2048:             # only needed for very large tiles (v5e 16 MiB default)
        cp_kwargs["vmem_limit_bytes"] = 64 * 1024 * 1024

    out = pl.pallas_call(
        discriminator_kernel,
        out_shape=jax.ShapeDtypeStruct((G, 1, tb), jnp.float32),
        grid_spec=pltpu.PrefetchScalarGridSpec(
            num_scalar_prefetch=0,
            grid=(G,),
            in_specs=[
                pl.BlockSpec((tb, E), lambda i: (i, 0)),    # x tile (pipelined, f32)
                pl.BlockSpec((E, H1), lambda i: (0, 0)),    # weights: VMEM-resident
                pl.BlockSpec((1, H1), lambda i: (0, 0)),
                pl.BlockSpec((H1, H2), lambda i: (0, 0)),
                pl.BlockSpec((1, H2), lambda i: (0, 0)),
                pl.BlockSpec((M3, H2), lambda i: (0, 0)),
                pl.BlockSpec(memory_space=pltpu.MemorySpace.SMEM),  # b3 scalar (1,1)
            ],
            out_specs=pl.BlockSpec((1, 1, tb), lambda i: (i, 0, 0)),
        ),
        compiler_params=pltpu.CompilerParams(**cp_kwargs),
    )(x, w1, b1, w2, b2, w3t, b3)

    # (G, 1, tb) lane-dense logits -> (B, 1); flatten order matches batch order.
    return out.reshape(-1)[:B].reshape(B, 1)


# ------------------------- parameter construction ---------------------------
def init_params(key, embedding_dim, m3_pad=16):
    """Synthetic params matching nn.Linear shapes; weights stored as W[in, out].
    f32 masters (used by the reference) plus bf16 kernel-ready copies so the
    hot path never re-casts weights."""
    dims = [(embedding_dim, 512), (512, 256), (256, 1)]
    keys = jax.random.split(key, 2 * len(dims))
    params = {}
    for idx, (fan_in, fan_out) in enumerate(dims, start=1):
        bound = 1.0 / np.sqrt(fan_in)
        w = jax.random.uniform(keys[2 * (idx - 1)], (fan_in, fan_out),
                               jnp.float32, -bound, bound)
        b = jax.random.uniform(keys[2 * (idx - 1) + 1], (fan_out,),
                               jnp.float32, -bound, bound)
        params[f"w{idx}"] = w
        params[f"b{idx}"] = b.reshape(1, fan_out)
    # Kernel-ready weights (cast once, outside the hot path).
    params["w1_bf16"] = params["w1"].astype(jnp.bfloat16)
    params["w2_bf16"] = params["w2"].astype(jnp.bfloat16)
    # Final layer stored transposed + sublane-padded: (16, 256), row 0 real.
    w3t = jnp.pad(params["w3"].T, ((0, m3_pad - 1), (0, 0)))
    params["w3t_bf16"] = w3t.astype(jnp.bfloat16)
    return params


def discriminator_reference(x, params):
    h1 = x @ params["w1"] + params["b1"]
    h1 = jnp.where(h1 > 0, h1, 0.2 * h1)
    h2 = h1 @ params["w2"] + params["b2"]
    h2 = jnp.where(h2 > 0, h2, 0.2 * h2)
    return jax.nn.sigmoid(h2 @ params["w3"] + params["b3"])


# ---------------------------------- main -------------------------------------
if __name__ == "__main__":
    embedding_dim = 64
    batch = 8

    key = jax.random.PRNGKey(0)
    k_x, k_p = jax.random.split(key)
    x = jax.random.normal(k_x, (batch, embedding_dim), jnp.float32)
    params = init_params(k_p, embedding_dim)

    out = jax.block_until_ready(discriminator_forward(x, params))
    ref = discriminator_reference(x, params)

    assert out.shape == (batch, 1)
    np.testing.assert_allclose(np.asarray(out), np.asarray(ref),
                               rtol=2e-2, atol=2e-2)
    print("KERNEL_OK")
</pallas_src>

<mosaic_0001>
module attributes {stable_mosaic.version = 11 : i64} {
  func.func @discriminator_kernel(%arg0: i32, %arg1: memref<128x64xf32, #tpu.memory_space<vmem>>, %arg2: memref<64x512xbf16, #tpu.memory_space<vmem>>, %arg3: memref<1x512xf32, #tpu.memory_space<vmem>>, %arg4: memref<512x256xbf16, #tpu.memory_space<vmem>>, %arg5: memref<1x256xf32, #tpu.memory_space<vmem>>, %arg6: memref<16x256xbf16, #tpu.memory_space<vmem>>, %arg7: memref<1x1xf32, #tpu.memory_space<smem>>, %arg8: memref<1x1x128xf32, #tpu.memory_space<vmem>>) attributes {dimension_semantics = [#tpu.dimension_semantics<parallel>], iteration_bounds = array<i64: 1>, scalar_prefetch = 0 : i64, scratch_operands = 0 : i64, tpu.core_type = #tpu.core_type<tc>, window_params = [{transform_indices = @transform_0, window_bounds = array<i64: 128, 64>}, {pipeline_mode = #tpu.pipeline_mode<synchronous>, transform_indices = @transform_1, window_bounds = array<i64: 64, 512>}, {pipeline_mode = #tpu.pipeline_mode<synchronous>, transform_indices = @transform_2, window_bounds = array<i64: 1, 512>}, {pipeline_mode = #tpu.pipeline_mode<synchronous>, transform_indices = @transform_3, window_bounds = array<i64: 512, 256>}, {pipeline_mode = #tpu.pipeline_mode<synchronous>, transform_indices = @transform_4, window_bounds = array<i64: 1, 256>}, {pipeline_mode = #tpu.pipeline_mode<synchronous>, transform_indices = @transform_5, window_bounds = array<i64: 16, 256>}, {transform_indices = @transform_6, window_bounds = array<i64: 1, 1>}, {transform_indices = @transform_7, window_bounds = array<i64: 1, 1, 128>}]} {
    %c0 = arith.constant 0 : index
    %c0_0 = arith.constant 0 : index
    %0 = vector.load %arg1[%c0, %c0_0] : memref<128x64xf32, #tpu.memory_space<vmem>>, vector<128x64xf32>
    %1 = arith.truncf %0 : vector<128x64xf32> to vector<128x64xbf16>
    %c0_1 = arith.constant 0 : index
    %c0_2 = arith.constant 0 : index
    %2 = vector.load %arg2[%c0_1, %c0_2] : memref<64x512xbf16, #tpu.memory_space<vmem>>, vector<64x512xbf16>
    %cst = arith.constant dense<0.000000e+00> : vector<128x512xf32>
    %3 = tpu.matmul %1, %2, %cst {dimension_numbers = #tpu.dot_dimension_numbers<[1], [0], [0], [1], [0, 0, 1, 1], [], []>} : vector<128x64xbf16>, vector<64x512xbf16>, vector<128x512xf32> -> vector<128x512xf32>
    %c0_3 = arith.constant 0 : index
    %c0_4 = arith.constant 0 : index
    %4 = vector.load %arg3[%c0_3, %c0_4] : memref<1x512xf32, #tpu.memory_space<vmem>>, vector<1x512xf32>
    %5 = vector.broadcast %4 : vector<1x512xf32> to vector<128x512xf32>
    %6 = arith.addf %3, %5 : vector<128x512xf32>
    %cst_5 = arith.constant 2.000000e-01 : f32
    %7 = vector.broadcast %cst_5 : f32 to vector<128x512xf32>
    %8 = arith.mulf %7, %6 : vector<128x512xf32>
    %9 = arith.maximumf %6, %8 : vector<128x512xf32>
    %10 = arith.truncf %9 : vector<128x512xf32> to vector<128x512xbf16>
    %c0_6 = arith.constant 0 : index
    %c0_7 = arith.constant 0 : index
    %11 = vector.load %arg4[%c0_6, %c0_7] : memref<512x256xbf16, #tpu.memory_space<vmem>>, vector<512x256xbf16>
    %cst_8 = arith.constant dense<0.000000e+00> : vector<128x256xf32>
    %12 = tpu.matmul %10, %11, %cst_8 {dimension_numbers = #tpu.dot_dimension_numbers<[1], [0], [0], [1], [0, 0, 1, 1], [], []>} : vector<128x512xbf16>, vector<512x256xbf16>, vector<128x256xf32> -> vector<128x256xf32>
    %c0_9 = arith.constant 0 : index
    %c0_10 = arith.constant 0 : index
    %13 = vector.load %arg5[%c0_9, %c0_10] : memref<1x256xf32, #tpu.memory_space<vmem>>, vector<1x256xf32>
    %14 = vector.broadcast %13 : vector<1x256xf32> to vector<128x256xf32>
    %15 = arith.addf %12, %14 : vector<128x256xf32>
    %cst_11 = arith.constant 2.000000e-01 : f32
    %16 = vector.broadcast %cst_11 : f32 to vector<128x256xf32>
    %17 = arith.mulf %16, %15 : vector<128x256xf32>
    %18 = arith.maximumf %15, %17 : vector<128x256xf32>
    %19 = arith.truncf %18 : vector<128x256xf32> to vector<128x256xbf16>
    %c0_12 = arith.constant 0 : index
    %c0_13 = arith.constant 0 : index
    %20 = vector.load %arg6[%c0_12, %c0_13] : memref<16x256xbf16, #tpu.memory_space<vmem>>, vector<16x256xbf16>
    %cst_14 = arith.constant dense<0.000000e+00> : vector<16x128xf32>
    %21 = tpu.matmul %20, %19, %cst_14 {dimension_numbers = #tpu.dot_dimension_numbers<[1], [1], [0], [0], [0, 0, 1, 0], [], []>} : vector<16x256xbf16>, vector<128x256xbf16>, vector<16x128xf32> -> vector<16x128xf32>
    %22 = vector.extract_strided_slice %21 {offsets = [0, 0], sizes = [1, 128], strides = [1, 1]} : vector<16x128xf32> to vector<1x128xf32>
    %c0_15 = arith.constant 0 : index
    %c0_16 = arith.constant 0 : index
    %23 = memref.load %arg7[%c0_15, %c0_16] : memref<1x1xf32, #tpu.memory_space<smem>>
    %24 = vector.broadcast %23 : f32 to vector<1x128xf32>
    %25 = arith.addf %22, %24 : vector<1x128xf32>
    %26 = arith.negf %25 : vector<1x128xf32>
    %27 = math.exp %26 : vector<1x128xf32>
    %cst_17 = arith.constant 1.000000e+00 : f32
    %28 = vector.broadcast %cst_17 : f32 to vector<1x128xf32>
    %29 = arith.addf %28, %27 : vector<1x128xf32>
    %30 = arith.divf %28, %29 : vector<1x128xf32>
    %31 = vector.shape_cast %30 : vector<1x128xf32> to vector<1x1x128xf32>
    %c0_18 = arith.constant 0 : index
    %c0_19 = arith.constant 0 : index
    %c0_20 = arith.constant 0 : index
    %32 = vector.load %arg8[%c0_18, %c0_19, %c0_20] : memref<1x1x128xf32, #tpu.memory_space<vmem>>, vector<1x1x128xf32>
    tpu.vector_store %arg8[%c0_18, %c0_19, %c0_20], %31 {strides = array<i32>} : memref<1x1x128xf32, #tpu.memory_space<vmem>>, vector<1x1x128xf32>,
    return
  }
  func.func @transform_0(%arg0: i32) -> (i32, i32) {
    %c0_i32 = arith.constant 0 : i32
    %c0_i32_0 = arith.constant 0 : i32
    return %arg0, %c0_i32 : i32, i32
  }
  func.func @transform_1(%arg0: i32) -> (i32, i32) {
    %c0_i32 = arith.constant 0 : i32
    %c0_i32_0 = arith.constant 0 : i32
    %c0_i32_1 = arith.constant 0 : i32
    return %c0_i32, %c0_i32_0 : i32, i32
  }
  func.func @transform_2(%arg0: i32) -> (i32, i32) {
    %c0_i32 = arith.constant 0 : i32
    %c0_i32_0 = arith.constant 0 : i32
    %c0_i32_1 = arith.constant 0 : i32
    return %c0_i32, %c0_i32_0 : i32, i32
  }
  func.func @transform_3(%arg0: i32) -> (i32, i32) {
    %c0_i32 = arith.constant 0 : i32
    %c0_i32_0 = arith.constant 0 : i32
    %c0_i32_1 = arith.constant 0 : i32
    return %c0_i32, %c0_i32_0 : i32, i32
  }
  func.func @transform_4(%arg0: i32) -> (i32, i32) {
    %c0_i32 = arith.constant 0 : i32
    %c0_i32_0 = arith.constant 0 : i32
    %c0_i32_1 = arith.constant 0 : i32
    return %c0_i32, %c0_i32_0 : i32, i32
  }
  func.func @transform_5(%arg0: i32) -> (i32, i32) {
    %c0_i32 = arith.constant 0 : i32
    %c0_i32_0 = arith.constant 0 : i32
    %c0_i32_1 = arith.constant 0 : i32
    return %c0_i32, %c0_i32_0 : i32, i32
  }
  func.func @transform_6(%arg0: i32) -> (i32, i32) {
    %c0_i32 = arith.constant 0 : i32
    %c0_i32_0 = arith.constant 0 : i32
    %c0_i32_1 = arith.constant 0 : i32
    return %c0_i32, %c0_i32_0 : i32, i32
  }
  func.func @transform_7(%arg0: i32) -> (i32, i32, i32) {
    %c0_i32 = arith.constant 0 : i32
    %c0_i32_0 = arith.constant 0 : i32
    %c0_i32_1 = arith.constant 0 : i32
    return %arg0, %c0_i32, %c0_i32_0 : i32, i32, i32
  }
}

</mosaic_0001>

<llo_original>
// kernel: tpu_custom_call.1
$region0: #{tpu_custom_call.1}
  #allocation0 [shape = 'u32[]', space=smem, size = 0x4, offset = 0x4, fixed_abs, tag = 'smem constant byte address 0x4 - core index']
  #allocation1 [shape = 'u32[144,128]{1,0:T(1,128)}', space=vmem, size = 0x12000, scoped, tag = 'internal scratch']
  #allocation2 [shape = 'f32[1,1]{1,0:T(1,128)S(6)}', space=smem, size = 0x200, scoped, tag = 'scoped memory for tpu_custom_call.1']
  %s0 = inlined_call_operand.vmem [shape: f32[128,64], index: 0, kind: input, shape index: {}]
  %s1 = inlined_call_operand.vmem [shape: bf16[64,512], index: 1, kind: input, shape index: {}]
  %s2 = inlined_call_operand.vmem [shape: f32[1,512], index: 2, kind: input, shape index: {}]
  %s3 = inlined_call_operand.hbm [shape: bf16[512,256], index: 3, kind: input, shape index: {}]
  %s4 = inlined_call_operand.vmem [shape: f32[1,256], index: 4, kind: input, shape index: {}]
  %s5 = inlined_call_operand.vmem [shape: bf16[16,256], index: 5, kind: input, shape index: {}]
  %s6 = inlined_call_operand.<no memory space> [shape: f32[1,1], index: 6, kind: input, shape index: {}]
  %s7 = inlined_call_operand.hbm [shape: f32[1,1,128], index: 7, kind: output, shape index: {}]
  %s8 = sld [smem:[#allocation0]]
  $region42: #{tpu_custom_call.1} parent=0
    _
  %s10 = ssub.s32 1, %s8
  %s11 = scalar_select 0, %s10, %s8
  %12 = sst [smem:[#allocation2]] %s6
  $region1: #{tpu_custom_call.1} parent=0
    #allocation3 [shape = 'u8[262144]{0}', space=vmem, size = 0x40000, scoped, tag = 'input window, operand 3, single buffered']
    #allocation4 [shape = 's32[1]{0}', space=sflag, size = 0x4, scoped, tag = 'scoped memory for tpu_custom_call.1']
    #allocation5 [shape = 's32[1]{0}', space=sflag, size = 0x4, scoped, tag = 'scoped memory for tpu_custom_call.1']
    #allocation6 [shape = 'u8[512]{0}', space=vmem, size = 0x400, scoped, tag = 'output window, operand 0, single buffered']
    %13 = vsyncpa [#allocation4], 0
    %14 = vsyncpa [#allocation5], 0
    // Predicated region
    $region2: #{tpu_custom_call.1} parent=1 // pred_check
      _
    $region3: #{tpu_custom_call.1} parent=1 // pred_check_branch
      %16 = sbr.rel (0) target = $region5
    $region4: #{tpu_custom_call.1} parent=1 // pred_region
      _
    $region5: #{tpu_custom_call.1} parent=1 // pred_fallthru
      _
    // Predicated region
    $region6: #{tpu_custom_call.1} parent=1 // pred_check
      _
    $region7: #{tpu_custom_call.1} parent=1 // pred_check_branch
      %18 = sbr.rel (0) target = $region9
    $region8: #{tpu_custom_call.1} parent=1 // pred_region
      _
    $region9: #{tpu_custom_call.1} parent=1 // pred_fallthru
      _
    // Predicated region
    $region10: #{tpu_custom_call.1} parent=1 // pred_check
      _
    $region11: #{tpu_custom_call.1} parent=1 // pred_check_branch
      %20 = sbr.rel (0) target = $region13
    $region12: #{tpu_custom_call.1} parent=1 // pred_region
      _
    $region13: #{tpu_custom_call.1} parent=1 // pred_fallthru
      _
    // Predicated region
    $region14: #{tpu_custom_call.1} parent=1 // pred_check
      _
    $region15: #{tpu_custom_call.1} parent=1 // pred_check_branch
      %22 = sbr.rel (0) target = $region17
    $region16: #{tpu_custom_call.1} parent=1 // pred_region
      %s24 = ssub.s32 8192, 8192
      %25 = vsyncadd [#allocation4], %s24
      %s26 = sshll.u32 [#allocation3], 4
      %s27 = int_to_ptr.vmem [resolvable:$true] %s26
      %32 = dma.hbm_to_vmem [thread:$0]  %s3, 8192, %s27, [#allocation4], 128, 128, 8
    $region17: #{tpu_custom_call.1} parent=1 // pred_fallthru
      _
    // Predicated region
    $region18: #{tpu_custom_call.1} parent=1 // pred_check
      _
    $region19: #{tpu_custom_call.1} parent=1 // pred_check_branch
      %34 = sbr.rel (0) target = $region21
    $region20: #{tpu_custom_call.1} parent=1 // pred_region
      _
    $region21: #{tpu_custom_call.1} parent=1 // pred_fallthru
      _
    // Predicated region
    $region22: #{tpu_custom_call.1} parent=1 // pred_check
      _
    $region23: #{tpu_custom_call.1} parent=1 // pred_check_branch
      %36 = sbr.rel (0) target = $region25
    $region24: #{tpu_custom_call.1} parent=1 // pred_region
      _
    $region25: #{tpu_custom_call.1} parent=1 // pred_fallthru
      _
    // Predicated region
    $region26: #{tpu_custom_call.1} parent=1 // pred_check
      _
    $region27: #{tpu_custom_call.1} parent=1 // pred_check_branch
      %38 = sbr.rel (0) target = $region29
    $region28: #{tpu_custom_call.1} parent=1 // pred_region
      _
    $region29: #{tpu_custom_call.1} parent=1 // pred_fallthru
      _
    // Predicated region
    $region30: #{tpu_custom_call.1} parent=1 // pred_check
      _
    $region31: #{tpu_custom_call.1} parent=1 // pred_check_branch
      %40 = sbr.rel (0) target = $region33
    $region32: #{tpu_custom_call.1} parent=1 // pred_region
      %41 = dma.done [#allocation4], 8192
    $region33: #{tpu_custom_call.1} parent=1 // pred_fallthru
      _
    %v43 = vld [vmem:[%s0] sm:$0xff]
    %v44 = vld [vmem:[%s0 + $0x8] sm:$0xff]
    %v45 = vld [vmem:[%s0 + $0x10] sm:$0xff]
    %v46 = vld [vmem:[%s0 + $0x18] sm:$0xff]
    %v47 = vld [vmem:[%s0 + $0x20] sm:$0xff]
    %v48 = vld [vmem:[%s0 + $0x28] sm:$0xff]
    %v49 = vld [vmem:[%s0 + $0x30] sm:$0xff]
    %v50 = vld [vmem:[%s0 + $0x38] sm:$0xff]
    %v51 = vld [vmem:[%s0 + $0x40] sm:$0xff]
    %v52 = vld [vmem:[%s0 + $0x48] sm:$0xff]
    %v53 = vld [vmem:[%s0 + $0x50] sm:$0xff]
    %v54 = vld [vmem:[%s0 + $0x58] sm:$0xff]
    %v55 = vld [vmem:[%s0 + $0x60] sm:$0xff]
    %v56 = vld [vmem:[%s0 + $0x68] sm:$0xff]
    %v57 = vld [vmem:[%s0 + $0x70] sm:$0xff]
    %v58 = vld [vmem:[%s0 + $0x78] sm:$0xff]
    %v59 = vpack.c.bf16 %v44, %v43
    %v60 = vpack.c.bf16 %v46, %v45
    %v61 = vpack.c.bf16 %v48, %v47
    %v62 = vpack.c.bf16 %v50, %v49
    %v63 = vpack.c.bf16 %v52, %v51
    %v64 = vpack.c.bf16 %v54, %v53
    %v65 = vpack.c.bf16 %v56, %v55
    %v66 = vpack.c.bf16 %v58, %v57
    %v67 = vld [vmem:[%s1] sm:$0xff]
    %v68 = vld [vmem:[%s1 + $0x8] sm:$0xff]
    %v69 = vld [vmem:[%s1 + $0x10] sm:$0xff]
    %v70 = vld [vmem:[%s1 + $0x18] sm:$0xff]
    %v71 = vld [vmem:[%s1 + $0x20] sm:$0xff]
    %v72 = vld [vmem:[%s1 + $0x28] sm:$0xff]
    %v73 = vld [vmem:[%s1 + $0x30] sm:$0xff]
    %v74 = vld [vmem:[%s1 + $0x38] sm:$0xff]
    %v75 = vld [vmem:[%s1 + $0x40] sm:$0xff]
    %v76 = vld [vmem:[%s1 + $0x48] sm:$0xff]
    %v77 = vld [vmem:[%s1 + $0x50] sm:$0xff]
    %v78 = vld [vmem:[%s1 + $0x58] sm:$0xff]
    %v79 = vld [vmem:[%s1 + $0x60] sm:$0xff]
    %v80 = vld [vmem:[%s1 + $0x68] sm:$0xff]
    %v81 = vld [vmem:[%s1 + $0x70] sm:$0xff]
    %v82 = vld [vmem:[%s1 + $0x78] sm:$0xff]
    %v83 = vld [vmem:[%s2] sm:$0xf]
    %v85 = vlaneseq
    %v86 = vshrl.u32 %v85, 7
    %v87 = vsub.s32 0, %v86
    %v88 = vrot.slane %v83, %v87
    %v89 = vlaneseq
    %v90 = vshrl.u32 %v89, 7
    %v91 = vsub.s32 1, %v90
    %v92 = vrot.slane %v83, %v91
    %v93 = vlaneseq
    %v94 = vshrl.u32 %v93, 7
    %v95 = vsub.s32 2, %v94
    %v96 = vrot.slane %v83, %v95
    %v97 = vlaneseq
    %v98 = vshrl.u32 %v97, 7
    %v99 = vsub.s32 3, %v98
    %v100 = vrot.slane %v83, %v99
    %v121 = vunpack.c.l.b16 %v67
    %v122 = vunpack.c.h.b16 %v67
    %v123 = vunpack.c.l.b16 %v68
    %v124 = vunpack.c.h.b16 %v68
    %v125 = vunpack.c.l.b16 %v69
    %v126 = vunpack.c.h.b16 %v69
    %v127 = vunpack.c.l.b16 %v70
    %v128 = vunpack.c.h.b16 %v70
    %v129 = vunpack.c.l.b16 %v71
    %v130 = vunpack.c.h.b16 %v71
    %v131 = vunpack.c.l.b16 %v72
    %v132 = vunpack.c.h.b16 %v72
    %v133 = vunpack.c.l.b16 %v73
    %v134 = vunpack.c.h.b16 %v73
    %v135 = vunpack.c.l.b16 %v74
    %v136 = vunpack.c.h.b16 %v74
    %v137 = vunpack.c.l.b16 %v75
    %v138 = vunpack.c.h.b16 %v75
    %v139 = vunpack.c.l.b16 %v76
    %v140 = vunpack.c.h.b16 %v76
    %v141 = vunpack.c.l.b16 %v77
    %v142 = vunpack.c.h.b16 %v77
    %v143 = vunpack.c.l.b16 %v78
    %v144 = vunpack.c.h.b16 %v78
    %v145 = vunpack.c.l.b16 %v79
    %v146 = vunpack.c.h.b16 %v79
    %v147 = vunpack.c.l.b16 %v80
    %v148 = vunpack.c.h.b16 %v80
    %v149 = vunpack.c.l.b16 %v81
    %v150 = vunpack.c.h.b16 %v81
    %v151 = vunpack.c.l.b16 %v82
    %v152 = vunpack.c.h.b16 %v82
    %v153 = vpack.c.b16 %v125, %v121
    %v154 = vpack.c.b16 %v126, %v122
    %v155 = vpack.c.b16 %v127, %v123
    %v156 = vpack.c.b16 %v128, %v124
    %v157 = vpack.c.b16 %v133, %v129
    %v158 = vpack.c.b16 %v134, %v130
    %v159 = vpack.c.b16 %v135, %v131
    %v160 = vpack.c.b16 %v136, %v132
    %v161 = vpack.c.b16 %v141, %v137
    %v162 = vpack.c.b16 %v142, %v138
    %v163 = vpack.c.b16 %v143, %v139
    %v164 = vpack.c.b16 %v144, %v140
    %v165 = vpack.c.b16 %v149, %v145
    %v166 = vpack.c.b16 %v150, %v146
    %v167 = vpack.c.b16 %v151, %v147
    %v168 = vpack.c.b16 %v152, %v148
    %vm185 = vcmask 523264
    %v187 = vsel %vm185, %v59, 0
    %v190 = vsel %vm185, %v60, 0
    %v193 = vsel %vm185, %v61, 0
    %v196 = vsel %vm185, %v62, 0
    %v199 = vsel %vm185, %v63, 0
    %v202 = vsel %vm185, %v64, 0
    %v205 = vsel %vm185, %v65, 0
    %v208 = vsel %vm185, %v66, 0
    %210 = vmatprep.subr.bf16.mxu0 %v154
    %211 = vmatpush1.bf16.msra.mxu0 %v153
    %212 = vmatprep.subr.bf16.mxu0 %v158
    %213 = vmatpush1.bf16.msra.mxu0 %v157
    %214 = vmatprep.subr.bf16.mxu0 %v162
    %215 = vmatpush1.bf16.msra.mxu0 %v161
    %216 = vmatprep.subr.bf16.mxu0 %v166
    %217 = vmatpush1.bf16.msra.mxu0 %v165
    %218 = vmatprep.subr.bf16.mxu0 0
    %219 = vmatpush1.bf16.msra.mxu0 0
    %220 = vmatprep.subr.bf16.mxu0 0
    %221 = vmatpush1.bf16.msra.mxu0 0
    %222 = vmatprep.subr.bf16.mxu0 0
    %223 = vmatpush1.bf16.msra.mxu0 0
    %224 = vmatprep.subr.bf16.mxu0 0
    %225 = vmatpush1.bf16.msra.mxu0 0
    %226 = vmatprep.subr.bf16.mxu0 0
    %227 = vmatpush1.bf16.msra.mxu0 0
    %228 = vmatprep.subr.bf16.mxu0 0
    %229 = vmatpush1.bf16.msra.mxu0 0
    %230 = vmatprep.subr.bf16.mxu0 0
    %231 = vmatpush1.bf16.msra.mxu0 0
    %232 = vmatprep.subr.bf16.mxu0 0
    %233 = vmatpush1.bf16.msra.mxu0 0
    %234 = vmatprep.subr.bf16.mxu0 0
    %235 = vmatpush1.bf16.msra.mxu0 0
    %236 = vmatprep.subr.bf16.mxu0 0
    %237 = vmatpush1.bf16.msra.mxu0 0
    %238 = vmatprep.subr.bf16.mxu0 0
    %239 = vmatpush1.bf16.msra.mxu0 0
    %240 = vmatprep.subr.bf16.mxu0 0
    %241 = vmatpush1.bf16.msra.mxu0 0
    %242 = vmatprep.mubr.bf16.mxu0 0
    %243 = vmatmul.mubr.bf16.gmra.mrb[0].mxu0 %v187
    %v244 = vpop.f32.mrb[0].mxu0
    %v245 = vadd.f32 %v88, %v244
    %v246 = vpop.f32.mrb[0].mxu0
    %v247 = vadd.f32 %v92, %v246
    %v248 = vpop.f32.mrb[0].mxu0
    %v249 = vadd.f32 %v88, %v248
    %v250 = vpop.f32.mrb[0].mxu0
    %v251 = vadd.f32 %v92, %v250
    %252 = vmatprep.mubr.bf16.mxu0 0
    %253 = vmatmul.mubr.bf16.gmra.mrb[0].mxu0 %v190
    %v254 = vpop.f32.mrb[0].mxu0
    %v255 = vadd.f32 %v88, %v254
    %v256 = vpop.f32.mrb[0].mxu0
    %v257 = vadd.f32 %v92, %v256
    %v258 = vpop.f32.mrb[0].mxu0
    %v259 = vadd.f32 %v88, %v258
    %v260 = vpop.f32.mrb[0].mxu0
    %v261 = vadd.f32 %v92, %v260
    %262 = vmatprep.mubr.bf16.mxu0 0
    %263 = vmatmul.mubr.bf16.gmra.mrb[0].mxu0 %v193
    %v264 = vpop.f32.mrb[0].mxu0
    %v265 = vadd.f32 %v88, %v264
    %v266 = vpop.f32.mrb[0].mxu0
    %v267 = vadd.f32 %v92, %v266
    %v268 = vpop.f32.mrb[0].mxu0
    %v269 = vadd.f32 %v88, %v268
    %v270 = vpop.f32.mrb[0].mxu0
    %v271 = vadd.f32 %v92, %v270
    %272 = vmatprep.mubr.bf16.mxu0 0
    %273 = vmatmul.mubr.bf16.gmra.mrb[0].mxu0 %v196
    %v274 = vpop.f32.mrb[0].mxu0
    %v275 = vadd.f32 %v88, %v274
    %v276 = vpop.f32.mrb[0].mxu0
    %v277 = vadd.f32 %v92, %v276
    %v278 = vpop.f32.mrb[0].mxu0
    %v279 = vadd.f32 %v88, %v278
    %v280 = vpop.f32.mrb[0].mxu0
    %v281 = vadd.f32 %v92, %v280
    %282 = vmatprep.mubr.bf16.mxu0 0
    %283 = vmatmul.mubr.bf16.gmra.mrb[0].mxu0 %v199
    %v284 = vpop.f32.mrb[0].mxu0
    %v285 = vadd.f32 %v88, %v284
    %v286 = vpop.f32.mrb[0].mxu0
    %v287 = vadd.f32 %v92, %v286
    %v288 = vpop.f32.mrb[0].mxu0
    %v289 = vadd.f32 %v88, %v288
    %v290 = vpop.f32.mrb[0].mxu0
    %v291 = vadd.f32 %v92, %v290
    %292 = vmatprep.mubr.bf16.mxu0 0
    %293 = vmatmul.mubr.bf16.gmra.mrb[0].mxu0 %v202
    %v294 = vpop.f32.mrb[0].mxu0
    %v295 = vadd.f32 %v88, %v294
    %v296 = vpop.f32.mrb[0].mxu0
    %v297 = vadd.f32 %v92, %v296
    %v298 = vpop.f32.mrb[0].mxu0
    %v299 = vadd.f32 %v88, %v298
    %v300 = vpop.f32.mrb[0].mxu0
    %v301 = vadd.f32 %v92, %v300
    %302 = vmatprep.mubr.bf16.mxu0 0
    %303 = vmatmul.mubr.bf16.gmra.mrb[0].mxu0 %v205
    %v304 = vpop.f32.mrb[0].mxu0
    %v305 = vadd.f32 %v88, %v304
    %v306 = vpop.f32.mrb[0].mxu0
    %v307 = vadd.f32 %v92, %v306
    %v308 = vpop.f32.mrb[0].mxu0
    %v309 = vadd.f32 %v88, %v308
    %v310 = vpop.f32.mrb[0].mxu0
    %v311 = vadd.f32 %v92, %v310
    %312 = vmatprep.mubr.bf16.mxu0 0
    %313 = vmatmul.mubr.bf16.gmra.mrb[0].mxu0 %v208
    %v314 = vpop.f32.mrb[0].mxu0
    %v315 = vadd.f32 %v88, %v314
    %v316 = vpop.f32.mrb[0].mxu0
    %v317 = vadd.f32 %v92, %v316
    %v318 = vpop.f32.mrb[0].mxu0
    %v319 = vadd.f32 %v88, %v318
    %v320 = vpop.f32.mrb[0].mxu0
    %v321 = vadd.f32 %v92, %v320
    %322 = vdwg.mxu0
    %323 = vmatprep.subr.bf16.mxu0 %v156
    %324 = vmatpush1.bf16.msra.mxu0 %v155
    %325 = vmatprep.subr.bf16.mxu0 %v160
    %326 = vmatpush1.bf16.msra.mxu0 %v159
    %327 = vmatprep.subr.bf16.mxu0 %v164
    %328 = vmatpush1.bf16.msra.mxu0 %v163
    %329 = vmatprep.subr.bf16.mxu0 %v168
    %330 = vmatpush1.bf16.msra.mxu0 %v167
    %331 = vmatprep.subr.bf16.mxu0 0
    %332 = vmatpush1.bf16.msra.mxu0 0
    %333 = vmatprep.subr.bf16.mxu0 0
    %334 = vmatpush1.bf16.msra.mxu0 0
    %335 = vmatprep.subr.bf16.mxu0 0
    %336 = vmatpush1.bf16.msra.mxu0 0
    %337 = vmatprep.subr.bf16.mxu0 0
    %338 = vmatpush1.bf16.msra.mxu0 0
    %339 = vmatprep.subr.bf16.mxu0 0
    %340 = vmatpush1.bf16.msra.mxu0 0
    %341 = vmatprep.subr.bf16.mxu0 0
    %342 = vmatpush1.bf16.msra.mxu0 0
    %343 = vmatprep.subr.bf16.mxu0 0
    %344 = vmatpush1.bf16.msra.mxu0 0
    %345 = vmatprep.subr.bf16.mxu0 0
    %346 = vmatpush1.bf16.msra.mxu0 0
    %347 = vmatprep.subr.bf16.mxu0 0
    %348 = vmatpush1.bf16.msra.mxu0 0
    %349 = vmatprep.subr.bf16.mxu0 0
    %350 = vmatpush1.bf16.msra.mxu0 0
    %351 = vmatprep.subr.bf16.mxu0 0
    %352 = vmatpush1.bf16.msra.mxu0 0
    %353 = vmatprep.subr.bf16.mxu0 0
    %354 = vmatpush1.bf16.msra.mxu0 0
    %355 = vmatprep.mubr.bf16.mxu0 0
    %356 = vmatmul.mubr.bf16.gmra.mrb[0].mxu0 %v187
    %v357 = vpop.f32.mrb[0].mxu0
    %v358 = vadd.f32 %v96, %v357
    %v359 = vpop.f32.mrb[0].mxu0
    %v360 = vadd.f32 %v100, %v359
    %v361 = vpop.f32.mrb[0].mxu0
    %v362 = vadd.f32 %v96, %v361
    %v363 = vpop.f32.mrb[0].mxu0
    %v364 = vadd.f32 %v100, %v363
    %365 = vmatprep.mubr.bf16.mxu0 0
    %366 = vmatmul.mubr.bf16.gmra.mrb[0].mxu0 %v190
    %v367 = vpop.f32.mrb[0].mxu0
    %v368 = vadd.f32 %v96, %v367
    %v369 = vpop.f32.mrb[0].mxu0
    %v370 = vadd.f32 %v100, %v369
    %v371 = vpop.f32.mrb[0].mxu0
    %v372 = vadd.f32 %v96, %v371
    %v373 = vpop.f32.mrb[0].mxu0
    %v374 = vadd.f32 %v100, %v373
    %375 = vmatprep.mubr.bf16.mxu0 0
    %376 = vmatmul.mubr.bf16.gmra.mrb[0].mxu0 %v193
    %v377 = vpop.f32.mrb[0].mxu0
    %v378 = vadd.f32 %v96, %v377
    %v379 = vpop.f32.mrb[0].mxu0
    %v380 = vadd.f32 %v100, %v379
    %v381 = vpop.f32.mrb[0].mxu0
    %v382 = vadd.f32 %v96, %v381
    %v383 = vpop.f32.mrb[0].mxu0
    %v384 = vadd.f32 %v100, %v383
    %385 = vmatprep.mubr.bf16.mxu0 0
    %386 = vmatmul.mubr.bf16.gmra.mrb[0].mxu0 %v196
    %v387 = vpop.f32.mrb[0].mxu0
    %v388 = vadd.f32 %v96, %v387
    %v389 = vpop.f32.mrb[0].mxu0
    %v390 = vadd.f32 %v100, %v389
    %v391 = vpop.f32.mrb[0].mxu0
    %v392 = vadd.f32 %v96, %v391
    %v393 = vpop.f32.mrb[0].mxu0
    %v394 = vadd.f32 %v100, %v393
    %395 = vmatprep.mubr.bf16.mxu0 0
    %396 = vmatmul.mubr.bf16.gmra.mrb[0].mxu0 %v199
    %v397 = vpop.f32.mrb[0].mxu0
    %v398 = vadd.f32 %v96, %v397
    %v399 = vpop.f32.mrb[0].mxu0
    %v400 = vadd.f32 %v100, %v399
    %v401 = vpop.f32.mrb[0].mxu0
    %v402 = vadd.f32 %v96, %v401
    %v403 = vpop.f32.mrb[0].mxu0
    %v404 = vadd.f32 %v100, %v403
    %405 = vmatprep.mubr.bf16.mxu0 0
    %406 = vmatmul.mubr.bf16.gmra.mrb[0].mxu0 %v202
    %v407 = vpop.f32.mrb[0].mxu0
    %v408 = vadd.f32 %v96, %v407
    %v409 = vpop.f32.mrb[0].mxu0
    %v410 = vadd.f32 %v100, %v409
    %v411 = vpop.f32.mrb[0].mxu0
    %v412 = vadd.f32 %v96, %v411
    %v413 = vpop.f32.mrb[0].mxu0
    %v414 = vadd.f32 %v100, %v413
    %415 = vmatprep.mubr.bf16.mxu0 0
    %416 = vmatmul.mubr.bf16.gmra.mrb[0].mxu0 %v205
    %v417 = vpop.f32.mrb[0].mxu0
    %v418 = vadd.f32 %v96, %v417
    %v419 = vpop.f32.mrb[0].mxu0
    %v420 = vadd.f32 %v100, %v419
    %v421 = vpop.f32.mrb[0].mxu0
    %v422 = vadd.f32 %v96, %v421
    %v423 = vpop.f32.mrb[0].mxu0
    %v424 = vadd.f32 %v100, %v423
    %425 = vmatprep.mubr.bf16.mxu0 0
    %426 = vmatmul.mubr.bf16.gmra.mrb[0].mxu0 %v208
    %v427 = vpop.f32.mrb[0].mxu0
    %v428 = vadd.f32 %v96, %v427
    %v429 = vpop.f32.mrb[0].mxu0
    %v430 = vadd.f32 %v100, %v429
    %v431 = vpop.f32.mrb[0].mxu0
    %v432 = vadd.f32 %v96, %v431
    %v433 = vpop.f32.mrb[0].mxu0
    %v434 = vadd.f32 %v100, %v433
    %435 = vdwg.mxu0
    %v436 = vmul.f32 %v245, 0.2
    %v437 = vmul.f32 %v247, 0.2
    %v438 = vmul.f32 %v358, 0.2
    %v439 = vmul.f32 %v360, 0.2
    %v440 = vmul.f32 %v249, 0.2
    %v441 = vmul.f32 %v251, 0.2
    %v442 = vmul.f32 %v362, 0.2
    %v443 = vmul.f32 %v364, 0.2
    %v444 = vmul.f32 %v255, 0.2
    %v445 = vmul.f32 %v257, 0.2
    %v446 = vmul.f32 %v368, 0.2
    %v447 = vmul.f32 %v370, 0.2
    %v448 = vmul.f32 %v259, 0.2
    %v449 = vmul.f32 %v261, 0.2
    %v450 = vmul.f32 %v372, 0.2
    %v451 = vmul.f32 %v374, 0.2
    %v452 = vmul.f32 %v265, 0.2
    %v453 = vmul.f32 %v267, 0.2
    %v454 = vmul.f32 %v378, 0.2
    %v455 = vmul.f32 %v380, 0.2
    %v456 = vmul.f32 %v269, 0.2
    %v457 = vmul.f32 %v271, 0.2
    %v458 = vmul.f32 %v382, 0.2
    %v459 = vmul.f32 %v384, 0.2
    %v460 = vmul.f32 %v275, 0.2
    %v461 = vmul.f32 %v277, 0.2
    %v462 = vmul.f32 %v388, 0.2
    %v463 = vmul.f32 %v390, 0.2
    %v464 = vmul.f32 %v279, 0.2
    %v465 = vmul.f32 %v281, 0.2
    %v466 = vmul.f32 %v392, 0.2
    %v467 = vmul.f32 %v394, 0.2
    %v468 = vmul.f32 %v285, 0.2
    %v469 = vmul.f32 %v287, 0.2
    %v470 = vmul.f32 %v398, 0.2
    %v471 = vmul.f32 %v400, 0.2
    %v472 = vmul.f32 %v289, 0.2
    %v473 = vmul.f32 %v291, 0.2
    %v474 = vmul.f32 %v402, 0.2
    %v475 = vmul.f32 %v404, 0.2
    %v476 = vmul.f32 %v295, 0.2
    %v477 = vmul.f32 %v297, 0.2
    %v478 = vmul.f32 %v408, 0.2
    %v479 = vmul.f32 %v410, 0.2
    %v480 = vmul.f32 %v299, 0.2
    %v481 = vmul.f32 %v301, 0.2
    %v482 = vmul.f32 %v412, 0.2
    %v483 = vmul.f32 %v414, 0.2
    %v484 = vmul.f32 %v305, 0.2
    %v485 = vmul.f32 %v307, 0.2
    %v486 = vmul.f32 %v418, 0.2
    %v487 = vmul.f32 %v420, 0.2
    %v488 = vmul.f32 %v309, 0.2
    %v489 = vmul.f32 %v311, 0.2
    %v490 = vmul.f32 %v422, 0.2
    %v491 = vmul.f32 %v424, 0.2
    %v492 = vmul.f32 %v315, 0.2
    %v493 = vmul.f32 %v317, 0.2
    %v494 = vmul.f32 %v428, 0.2
    %v495 = vmul.f32 %v430, 0.2
    %v496 = vmul.f32 %v319, 0.2
    %v497 = vmul.f32 %v321, 0.2
    %v498 = vmul.f32 %v432, 0.2
    %v499 = vmul.f32 %v434, 0.2
    %v500 = vmax.f32 %v245, %v436
    %v501 = vmax.f32 %v247, %v437
    %v502 = vmax.f32 %v358, %v438
    %v503 = vmax.f32 %v360, %v439
    %v504 = vmax.f32 %v249, %v440
    %v505 = vmax.f32 %v251, %v441
    %v506 = vmax.f32 %v362, %v442
    %v507 = vmax.f32 %v364, %v443
    %v508 = vmax.f32 %v255, %v444
    %v509 = vmax.f32 %v257, %v445
    %v510 = vmax.f32 %v368, %v446
    %v511 = vmax.f32 %v370, %v447
    %v512 = vmax.f32 %v259, %v448
    %v513 = vmax.f32 %v261, %v449
    %v514 = vmax.f32 %v372, %v450
    %v515 = vmax.f32 %v374, %v451
    %v516 = vmax.f32 %v265, %v452
    %v517 = vmax.f32 %v267, %v453
    %v518 = vmax.f32 %v378, %v454
    %v519 = vmax.f32 %v380, %v455
    %v520 = vmax.f32 %v269, %v456
    %v521 = vmax.f32 %v271, %v457
    %v522 = vmax.f32 %v382, %v458
    %v523 = vmax.f32 %v384, %v459
    %v524 = vmax.f32 %v275, %v460
    %v525 = vmax.f32 %v277, %v461
    %v526 = vmax.f32 %v388, %v462
    %v527 = vmax.f32 %v390, %v463
    %v528 = vmax.f32 %v279, %v464
    %v529 = vmax.f32 %v281, %v465
    %v530 = vmax.f32 %v392, %v466
    %v531 = vmax.f32 %v394, %v467
    %v532 = vmax.f32 %v285, %v468
    %v533 = vmax.f32 %v287, %v469
    %v534 = vmax.f32 %v398, %v470
    %v535 = vmax.f32 %v400, %v471
    %v536 = vmax.f32 %v289, %v472
    %v537 = vmax.f32 %v291, %v473
    %v538 = vmax.f32 %v402, %v474
    %v539 = vmax.f32 %v404, %v475
    %v540 = vmax.f32 %v295, %v476
    %v541 = vmax.f32 %v297, %v477
    %v542 = vmax.f32 %v408, %v478
    %v543 = vmax.f32 %v410, %v479
    %v544 = vmax.f32 %v299, %v480
    %v545 = vmax.f32 %v301, %v481
    %v546 = vmax.f32 %v412, %v482
    %v547 = vmax.f32 %v414, %v483
    %v548 = vmax.f32 %v305, %v484
    %v549 = vmax.f32 %v307, %v485
    %v550 = vmax.f32 %v418, %v486
    %v551 = vmax.f32 %v420, %v487
    %v552 = vmax.f32 %v309, %v488
    %v553 = vmax.f32 %v311, %v489
    %v554 = vmax.f32 %v422, %v490
    %v555 = vmax.f32 %v424, %v491
    %v556 = vmax.f32 %v315, %v492
    %v557 = vmax.f32 %v317, %v493
    %v558 = vmax.f32 %v428, %v494
    %v559 = vmax.f32 %v430, %v495
    %v560 = vmax.f32 %v319, %v496
    %v561 = vmax.f32 %v321, %v497
    %v562 = vmax.f32 %v432, %v498
    %v563 = vmax.f32 %v434, %v499
    %v564 = vpack.c.bf16 %v504, %v500
    %v565 = vpack.c.bf16 %v505, %v501
    %v566 = vpack.c.bf16 %v506, %v502
    %v567 = vpack.c.bf16 %v507, %v503
    %v568 = vpack.c.bf16 %v512, %v508
    %v569 = vpack.c.bf16 %v513, %v509
    %v570 = vpack.c.bf16 %v514, %v510
    %v571 = vpack.c.bf16 %v515, %v511
    %v572 = vpack.c.bf16 %v520, %v516
    %v573 = vpack.c.bf16 %v521, %v517
    %v574 = vpack.c.bf16 %v522, %v518
    %v575 = vpack.c.bf16 %v523, %v519
    %v576 = vpack.c.bf16 %v528, %v524
    %v577 = vpack.c.bf16 %v529, %v525
    %v578 = vpack.c.bf16 %v530, %v526
    %v579 = vpack.c.bf16 %v531, %v527
    %v580 = vpack.c.bf16 %v536, %v532
    %v581 = vpack.c.bf16 %v537, %v533
    %v582 = vpack.c.bf16 %v538, %v534
    %v583 = vpack.c.bf16 %v539, %v535
    %v584 = vpack.c.bf16 %v544, %v540
    %v585 = vpack.c.bf16 %v545, %v541
    %v586 = vpack.c.bf16 %v546, %v542
    %v587 = vpack.c.bf16 %v547, %v543
    %v588 = vpack.c.bf16 %v552, %v548
    %v589 = vpack.c.bf16 %v553, %v549
    %v590 = vpack.c.bf16 %v554, %v550
    %v591 = vpack.c.bf16 %v555, %v551
    %v592 = vpack.c.bf16 %v560, %v556
    %v593 = vpack.c.bf16 %v561, %v557
    %v594 = vpack.c.bf16 %v562, %v558
    %v595 = vpack.c.bf16 %v563, %v559
    %v596 = vld [vmem:[#allocation3] sm:$0xff]
    %v597 = vld [vmem:[#allocation3 + $0x8] sm:$0xff]
    %v598 = vld [vmem:[#allocation3 + $0x10] sm:$0xff]
    %v599 = vld [vmem:[#allocation3 + $0x18] sm:$0xff]
    %v600 = vld [vmem:[#allocation3 + $0x20] sm:$0xff]
    %v601 = vld [vmem:[#allocation3 + $0x28] sm:$0xff]
    %v602 = vld [vmem:[#allocation3 + $0x30] sm:$0xff]
    %v603 = vld [vmem:[#allocation3 + $0x38] sm:$0xff]
    %v604 = vld [vmem:[#allocation3 + $0x40] sm:$0xff]
    %v605 = vld [vmem:[#allocation3 + $0x48] sm:$0xff]
    %v606 = vld [vmem:[#allocation3 + $0x50] sm:$0xff]
    %v607 = vld [vmem:[#allocation3 + $0x58] sm:$0xff]
    %v608 = vld [vmem:[#allocation3 + $0x60] sm:$0xff]
    %v609 = vld [vmem:[#allocation3 + $0x68] sm:$0xff]
    %v610 = vld [vmem:[#allocation3 + $0x70] sm:$0xff]
    %v611 = vld [vmem:[#allocation3 + $0x78] sm:$0xff]
    %v612 = vld [vmem:[#allocation3 + $0x80] sm:$0xff]
    %v613 = vld [vmem:[#allocation3 + $0x88] sm:$0xff]
    %v614 = vld [vmem:[#allocation3 + $0x90] sm:$0xff]
    %v615 = vld [vmem:[#allocation3 + $0x98] sm:$0xff]
    %v616 = vld [vmem:[#allocation3 + $0xa0] sm:$0xff]
    %v617 = vld [vmem:[#allocation3 + $0xa8] sm:$0xff]
    %v618 = vld [vmem:[#allocation3 + $0xb0] sm:$0xff]
    %v619 = vld [vmem:[#allocation3 + $0xb8] sm:$0xff]
    %v620 = vld [vmem:[#allocation3 + $0xc0] sm:$0xff]
    %v621 = vld [vmem:[#allocation3 + $0xc8] sm:$0xff]
    %v622 = vld [vmem:[#allocation3 + $0xd0] sm:$0xff]
    %v623 = vld [vmem:[#allocation3 + $0xd8] sm:$0xff]
    %v624 = vld [vmem:[#allocation3 + $0xe0] sm:$0xff]
    %v625 = vld [vmem:[#allocation3 + $0xe8] sm:$0xff]
    %v626 = vld [vmem:[#allocation3 + $0xf0] sm:$0xff]
    %v627 = vld [vmem:[#allocation3 + $0xf8] sm:$0xff]
    %v628 = vld [vmem:[#allocation3 + $0x100] sm:$0xff]
    %v629 = vld [vmem:[#allocation3 + $0x108] sm:$0xff]
    %v630 = vld [vmem:[#allocation3 + $0x110] sm:$0xff]
    %v631 = vld [vmem:[#allocation3 + $0x118] sm:$0xff]
    %v632 = vld [vmem:[#allocation3 + $0x120] sm:$0xff]
    %v633 = vld [vmem:[#allocation3 + $0x128] sm:$0xff]
    %v634 = vld [vmem:[#allocation3 + $0x130] sm:$0xff]
    %v635 = vld [vmem:[#allocation3 + $0x138] sm:$0xff]
    %v636 = vld [vmem:[#allocation3 + $0x140] sm:$0xff]
    %v637 = vld [vmem:[#allocation3 + $0x148] sm:$0xff]
    %v638 = vld [vmem:[#allocation3 + $0x150] sm:$0xff]
    %v639 = vld [vmem:[#allocation3 + $0x158] sm:$0xff]
    %v640 = vld [vmem:[#allocation3 + $0x160] sm:$0xff]
    %v641 = vld [vmem:[#allocation3 + $0x168] sm:$0xff]
    %v642 = vld [vmem:[#allocation3 + $0x170] sm:$0xff]
    %v643 = vld [vmem:[#allocation3 + $0x178] sm:$0xff]
    %v644 = vld [vmem:[#allocation3 + $0x180] sm:$0xff]
    %v645 = vld [vmem:[#allocation3 + $0x188] sm:$0xff]
    %v646 = vld [vmem:[#allocation3 + $0x190] sm:$0xff]
    %v647 = vld [vmem:[#allocation3 + $0x198] sm:$0xff]
    %v648 = vld [vmem:[#allocation3 + $0x1a0] sm:$0xff]
    %v649 = vld [vmem:[#allocation3 + $0x1a8] sm:$0xff]
    %v650 = vld [vmem:[#allocation3 + $0x1b0] sm:$0xff]
    %v651 = vld [vmem:[#allocation3 + $0x1b8] sm:$0xff]
    %v652 = vld [vmem:[#allocation3 + $0x1c0] sm:$0xff]
    %v653 = vld [vmem:[#allocation3 + $0x1c8] sm:$0xff]
    %v654 = vld [vmem:[#allocation3 + $0x1d0] sm:$0xff]
    %v655 = vld [vmem:[#allocation3 + $0x1d8] sm:$0xff]
    %v656 = vld [vmem:[#allocation3 + $0x1e0] sm:$0xff]
    %v657 = vld [vmem:[#allocation3 + $0x1e8] sm:$0xff]
    %v658 = vld [vmem:[#allocation3 + $0x1f0] sm:$0xff]
    %v659 = vld [vmem:[#allocation3 + $0x1f8] sm:$0xff]
    %v660 = vld [vmem:[%s4] sm:$0x3]
    %v662 = vlaneseq
    %v663 = vshrl.u32 %v662, 7
    %v664 = vsub.s32 0, %v663
    %v665 = vrot.slane %v660, %v664
    %v666 = vlaneseq
    %v667 = vshrl.u32 %v666, 7
    %v668 = vsub.s32 1, %v667
    %v669 = vrot.slane %v660, %v668
    %v736 = vunpack.c.l.b16 %v596
    %v737 = vunpack.c.h.b16 %v596
    %v738 = vunpack.c.l.b16 %v597
    %v739 = vunpack.c.h.b16 %v597
    %v740 = vunpack.c.l.b16 %v598
    %v741 = vunpack.c.h.b16 %v598
    %v742 = vunpack.c.l.b16 %v599
    %v743 = vunpack.c.h.b16 %v599
    %v744 = vunpack.c.l.b16 %v600
    %v745 = vunpack.c.h.b16 %v600
    %v746 = vunpack.c.l.b16 %v601
    %v747 = vunpack.c.h.b16 %v601
    %v748 = vunpack.c.l.b16 %v602
    %v749 = vunpack.c.h.b16 %v602
    %v750 = vunpack.c.l.b16 %v603
    %v751 = vunpack.c.h.b16 %v603
    %v752 = vunpack.c.l.b16 %v604
    %v753 = vunpack.c.h.b16 %v604
    %v754 = vunpack.c.l.b16 %v605
    %v755 = vunpack.c.h.b16 %v605
    %v756 = vunpack.c.l.b16 %v606
    %v757 = vunpack.c.h.b16 %v606
    %v758 = vunpack.c.l.b16 %v607
    %v759 = vunpack.c.h.b16 %v607
    %v760 = vunpack.c.l.b16 %v608
    %v761 = vunpack.c.h.b16 %v608
    %v762 = vunpack.c.l.b16 %v609
    %v763 = vunpack.c.h.b16 %v609
    %v764 = vunpack.c.l.b16 %v610
    %v765 = vunpack.c.h.b16 %v610
    %v766 = vunpack.c.l.b16 %v611
    %v767 = vunpack.c.h.b16 %v611
    %v768 = vunpack.c.l.b16 %v612
    %v769 = vunpack.c.h.b16 %v612
    %v770 = vunpack.c.l.b16 %v613
    %v771 = vunpack.c.h.b16 %v613
    %v772 = vunpack.c.l.b16 %v614
    %v773 = vunpack.c.h.b16 %v614
    %v774 = vunpack.c.l.b16 %v615
    %v775 = vunpack.c.h.b16 %v615
    %v776 = vunpack.c.l.b16 %v616
    %v777 = vunpack.c.h.b16 %v616
    %v778 = vunpack.c.l.b16 %v617
    %v779 = vunpack.c.h.b16 %v617
    %v780 = vunpack.c.l.b16 %v618
    %v781 = vunpack.c.h.b16 %v618
    %v782 = vunpack.c.l.b16 %v619
    %v783 = vunpack.c.h.b16 %v619
    %v784 = vunpack.c.l.b16 %v620
    %v785 = vunpack.c.h.b16 %v620
    %v786 = vunpack.c.l.b16 %v621
    %v787 = vunpack.c.h.b16 %v621
    %v788 = vunpack.c.l.b16 %v622
    %v789 = vunpack.c.h.b16 %v622
    %v790 = vunpack.c.l.b16 %v623
    %v791 = vunpack.c.h.b16 %v623
    %v792 = vunpack.c.l.b16 %v624
    %v793 = vunpack.c.h.b16 %v624
    %v794 = vunpack.c.l.b16 %v625
    %v795 = vunpack.c.h.b16 %v625
    %v796 = vunpack.c.l.b16 %v626
    %v797 = vunpack.c.h.b16 %v626
    %v798 = vunpack.c.l.b16 %v627
    %v799 = vunpack.c.h.b16 %v627
    %v800 = vunpack.c.l.b16 %v628
    %v801 = vunpack.c.h.b16 %v628
    %v802 = vunpack.c.l.b16 %v629
    %v803 = vunpack.c.h.b16 %v629
    %v804 = vunpack.c.l.b16 %v630
    %v805 = vunpack.c.h.b16 %v630
    %v806 = vunpack.c.l.b16 %v631
    %v807 = vunpack.c.h.b16 %v631
    %v808 = vunpack.c.l.b16 %v632
    %v809 = vunpack.c.h.b16 %v632
    %v810 = vunpack.c.l.b16 %v633
    %v811 = vunpack.c.h.b16 %v633
    %v812 = vunpack.c.l.b16 %v634
    %v813 = vunpack.c.h.b16 %v634
    %v814 = vunpack.c.l.b16 %v635
    %v815 = vunpack.c.h.b16 %v635
    %v816 = vunpack.c.l.b16 %v636
    %v817 = vunpack.c.h.b16 %v636
    %v818 = vunpack.c.l.b16 %v637
    %v819 = vunpack.c.h.b16 %v637
    %v820 = vunpack.c.l.b16 %v638
    %v821 = vunpack.c.h.b16 %v638
    %v822 = vunpack.c.l.b16 %v639
    %v823 = vunpack.c.h.b16 %v639
    %v824 = vunpack.c.l.b16 %v640
    %v825 = vunpack.c.h.b16 %v640
    %v826 = vunpack.c.l.b16 %v641
    %v827 = vunpack.c.h.b16 %v641
    %v828 = vunpack.c.l.b16 %v642
    %v829 = vunpack.c.h.b16 %v642
    %v830 = vunpack.c.l.b16 %v643
    %v831 = vunpack.c.h.b16 %v643
    %v832 = vunpack.c.l.b16 %v644
    %v833 = vunpack.c.h.b16 %v644
    %v834 = vunpack.c.l.b16 %v645
    %v835 = vunpack.c.h.b16 %v645
    %v836 = vunpack.c.l.b16 %v646
    %v837 = vunpack.c.h.b16 %v646
    %v838 = vunpack.c.l.b16 %v647
    %v839 = vunpack.c.h.b16 %v647
    %v840 = vunpack.c.l.b16 %v648
    %v841 = vunpack.c.h.b16 %v648
    %v842 = vunpack.c.l.b16 %v649
    %v843 = vunpack.c.h.b16 %v649
    %v844 = vunpack.c.l.b16 %v650
    %v845 = vunpack.c.h.b16 %v650
    %v846 = vunpack.c.l.b16 %v651
    %v847 = vunpack.c.h.b16 %v651
    %v848 = vunpack.c.l.b16 %v652
    %v849 = vunpack.c.h.b16 %v652
    %v850 = vunpack.c.l.b16 %v653
    %v851 = vunpack.c.h.b16 %v653
    %v852 = vunpack.c.l.b16 %v654
    %v853 = vunpack.c.h.b16 %v654
    %v854 = vunpack.c.l.b16 %v655
    %v855 = vunpack.c.h.b16 %v655
    %v856 = vunpack.c.l.b16 %v656
    %v857 = vunpack.c.h.b16 %v656
    %v858 = vunpack.c.l.b16 %v657
    %v859 = vunpack.c.h.b16 %v657
    %v860 = vunpack.c.l.b16 %v658
    %v861 = vunpack.c.h.b16 %v658
    %v862 = vunpack.c.l.b16 %v659
    %v863 = vunpack.c.h.b16 %v659
    %v864 = vpack.c.b16 %v738, %v736
    %v865 = vpack.c.b16 %v739, %v737
    %v866 = vpack.c.b16 %v742, %v740
    %v867 = vpack.c.b16 %v743, %v741
    %v868 = vpack.c.b16 %v746, %v744
    %v869 = vpack.c.b16 %v747, %v745
    %v870 = vpack.c.b16 %v750, %v748
    %v871 = vpack.c.b16 %v751, %v749
    %v872 = vpack.c.b16 %v754, %v752
    %v873 = vpack.c.b16 %v755, %v753
    %v874 = vpack.c.b16 %v758, %v756
    %v875 = vpack.c.b16 %v759, %v757
    %v876 = vpack.c.b16 %v762, %v760
    %v877 = vpack.c.b16 %v763, %v761
    %v878 = vpack.c.b16 %v766, %v764
    %v879 = vpack.c.b16 %v767, %v765
    %v880 = vpack.c.b16 %v770, %v768
    %v881 = vpack.c.b16 %v771, %v769
    %v882 = vpack.c.b16 %v774, %v772
    %v883 = vpack.c.b16 %v775, %v773
    %v884 = vpack.c.b16 %v778, %v776
    %v885 = vpack.c.b16 %v779, %v777
    %v886 = vpack.c.b16 %v782, %v780
    %v887 = vpack.c.b16 %v783, %v781
    %v888 = vpack.c.b16 %v786, %v784
    %v889 = vpack.c.b16 %v787, %v785
    %v890 = vpack.c.b16 %v790, %v788
    %v891 = vpack.c.b16 %v791, %v789
    %v892 = vpack.c.b16 %v794, %v792
    %v893 = vpack.c.b16 %v795, %v793
    %v894 = vpack.c.b16 %v798, %v796
    %v895 = vpack.c.b16 %v799, %v797
    %v896 = vpack.c.b16 %v802, %v800
    %v897 = vpack.c.b16 %v803, %v801
    %v898 = vpack.c.b16 %v806, %v804
    %v899 = vpack.c.b16 %v807, %v805
    %v900 = vpack.c.b16 %v810, %v808
    %v901 = vpack.c.b16 %v811, %v809
    %v902 = vpack.c.b16 %v814, %v812
    %v903 = vpack.c.b16 %v815, %v813
    %v904 = vpack.c.b16 %v818, %v816
    %v905 = vpack.c.b16 %v819, %v817
    %v906 = vpack.c.b16 %v822, %v820
    %v907 = vpack.c.b16 %v823, %v821
    %v908 = vpack.c.b16 %v826, %v824
    %v909 = vpack.c.b16 %v827, %v825
    %v910 = vpack.c.b16 %v830, %v828
    %v911 = vpack.c.b16 %v831, %v829
    %v912 = vpack.c.b16 %v834, %v832
    %v913 = vpack.c.b16 %v835, %v833
    %v914 = vpack.c.b16 %v838, %v836
    %v915 = vpack.c.b16 %v839, %v837
    %v916 = vpack.c.b16 %v842, %v840
    %v917 = vpack.c.b16 %v843, %v841
    %v918 = vpack.c.b16 %v846, %v844
    %v919 = vpack.c.b16 %v847, %v845
    %v920 = vpack.c.b16 %v850, %v848
    %v921 = vpack.c.b16 %v851, %v849
    %v922 = vpack.c.b16 %v854, %v852
    %v923 = vpack.c.b16 %v855, %v853
    %v924 = vpack.c.b16 %v858, %v856
    %v925 = vpack.c.b16 %v859, %v857
    %v926 = vpack.c.b16 %v862, %v860
    %v927 = vpack.c.b16 %v863, %v861
    %992 = vmatprep.subr.bf16.mxu0 %v865
    %993 = vmatpush1.bf16.msra.mxu0 %v864
    %994 = vmatprep.subr.bf16.mxu0 %v867
    %995 = vmatpush1.bf16.msra.mxu0 %v866
    %996 = vmatprep.subr.bf16.mxu0 %v869
    %997 = vmatpush1.bf16.msra.mxu0 %v868
    %998 = vmatprep.subr.bf16.mxu0 %v871
    %999 = vmatpush1.bf16.msra.mxu0 %v870
    %1000 = vmatprep.subr.bf16.mxu0 %v873
    %1001 = vmatpush1.bf16.msra.mxu0 %v872
    %1002 = vmatprep.subr.bf16.mxu0 %v875
    %1003 = vmatpush1.bf16.msra.mxu0 %v874
    %1004 = vmatprep.subr.bf16.mxu0 %v877
    %1005 = vmatpush1.bf16.msra.mxu0 %v876
    %1006 = vmatprep.subr.bf16.mxu0 %v879
    %1007 = vmatpush1.bf16.msra.mxu0 %v878
    %1008 = vmatprep.subr.bf16.mxu0 %v881
    %1009 = vmatpush1.bf16.msra.mxu0 %v880
    %1010 = vmatprep.subr.bf16.mxu0 %v883
    %1011 = vmatpush1.bf16.msra.mxu0 %v882
    %1012 = vmatprep.subr.bf16.mxu0 %v885
    %1013 = vmatpush1.bf16.msra.mxu0 %v884
    %1014 = vmatprep.subr.bf16.mxu0 %v887
    %1015 = vmatpush1.bf16.msra.mxu0 %v886
    %1016 = vmatprep.subr.bf16.mxu0 %v889
    %1017 = vmatpush1.bf16.msra.mxu0 %v888
    %1018 = vmatprep.subr.bf16.mxu0 %v891
    %1019 = vmatpush1.bf16.msra.mxu0 %v890
    %1020 = vmatprep.subr.bf16.mxu0 %v893
    %1021 = vmatpush1.bf16.msra.mxu0 %v892
    %1022 = vmatprep.subr.bf16.mxu0 %v895
    %1023 = vmatpush1.bf16.msra.mxu0 %v894
    %1024 = vmatprep.mubr.bf16.mxu0 %v565
    %1025 = vmatmul.mubr.bf16.gmra.mrb[0].mxu0 %v564
    %v1026 = vpop.f32.mrb[0].mxu0
    %v1027 = vadd.f32 %v665, %v1026
    %v1028 = vpop.f32.mrb[0].mxu0
    %v1029 = vadd.f32 %v669, %v1028
    %v1030 = vpop.f32.mrb[0].mxu0
    %v1031 = vadd.f32 %v665, %v1030
    %v1032 = vpop.f32.mrb[0].mxu0
    %v1033 = vadd.f32 %v669, %v1032
    %1034 = vmatprep.mubr.bf16.mxu0 %v569
    %1035 = vmatmul.mubr.bf16.gmra.mrb[0].mxu0 %v568
    %v1036 = vpop.f32.mrb[0].mxu0
    %v1037 = vadd.f32 %v665, %v1036
    %v1038 = vpop.f32.mrb[0].mxu0
    %v1039 = vadd.f32 %v669, %v1038
    %v1040 = vpop.f32.mrb[0].mxu0
    %v1041 = vadd.f32 %v665, %v1040
    %v1042 = vpop.f32.mrb[0].mxu0
    %v1043 = vadd.f32 %v669, %v1042
    %1044 = vmatprep.mubr.bf16.mxu0 %v573
    %1045 = vmatmul.mubr.bf16.gmra.mrb[0].mxu0 %v572
    %v1046 = vpop.f32.mrb[0].mxu0
    %v1047 = vadd.f32 %v665, %v1046
    %v1048 = vpop.f32.mrb[0].mxu0
    %v1049 = vadd.f32 %v669, %v1048
    %v1050 = vpop.f32.mrb[0].mxu0
    %v1051 = vadd.f32 %v665, %v1050
    %v1052 = vpop.f32.mrb[0].mxu0
    %v1053 = vadd.f32 %v669, %v1052
    %1054 = vmatprep.mubr.bf16.mxu0 %v577
    %1055 = vmatmul.mubr.bf16.gmra.mrb[0].mxu0 %v576
    %v1056 = vpop.f32.mrb[0].mxu0
    %v1057 = vadd.f32 %v665, %v1056
    %v1058 = vpop.f32.mrb[0].mxu0
    %v1059 = vadd.f32 %v669, %v1058
    %v1060 = vpop.f32.mrb[0].mxu0
    %v1061 = vadd.f32 %v665, %v1060
    %v1062 = vpop.f32.mrb[0].mxu0
    %v1063 = vadd.f32 %v669, %v1062
    %1064 = vmatprep.mubr.bf16.mxu0 %v581
    %1065 = vmatmul.mubr.bf16.gmra.mrb[0].mxu0 %v580
    %v1066 = vpop.f32.mrb[0].mxu0
    %v1067 = vadd.f32 %v665, %v1066
    %v1068 = vpop.f32.mrb[0].mxu0
    %v1069 = vadd.f32 %v669, %v1068
    %v1070 = vpop.f32.mrb[0].mxu0
    %v1071 = vadd.f32 %v665, %v1070
    %v1072 = vpop.f32.mrb[0].mxu0
    %v1073 = vadd.f32 %v669, %v1072
    %1074 = vmatprep.mubr.bf16.mxu0 %v585
    %1075 = vmatmul.mubr.bf16.gmra.mrb[0].mxu0 %v584
    %v1076 = vpop.f32.mrb[0].mxu0
    %v1077 = vadd.f32 %v665, %v1076
    %v1078 = vpop.f32.mrb[0].mxu0
    %v1079 = vadd.f32 %v669, %v1078
    %v1080 = vpop.f32.mrb[0].mxu0
    %v1081 = vadd.f32 %v665, %v1080
    %v1082 = vpop.f32.mrb[0].mxu0
    %v1083 = vadd.f32 %v669, %v1082
    %1084 = vmatprep.mubr.bf16.mxu0 %v589
    %1085 = vmatmul.mubr.bf16.gmra.mrb[0].mxu0 %v588
    %v1086 = vpop.f32.mrb[0].mxu0
    %v1087 = vadd.f32 %v665, %v1086
    %v1088 = vpop.f32.mrb[0].mxu0
    %v1089 = vadd.f32 %v669, %v1088
    %v1090 = vpop.f32.mrb[0].mxu0
    %v1091 = vadd.f32 %v665, %v1090
    %v1092 = vpop.f32.mrb[0].mxu0
    %v1093 = vadd.f32 %v669, %v1092
    %1094 = vmatprep.mubr.bf16.mxu0 %v593
    %1095 = vmatmul.mubr.bf16.gmra.mrb[0].mxu0 %v592
    %v1096 = vpop.f32.mrb[0].mxu0
    %v1097 = vadd.f32 %v665, %v1096
    %v1098 = vpop.f32.mrb[0].mxu0
    %v1099 = vadd.f32 %v669, %v1098
    %v1100 = vpop.f32.mrb[0].mxu0
    %v1101 = vadd.f32 %v665, %v1100
    %v1102 = vpop.f32.mrb[0].mxu0
    %v1103 = vadd.f32 %v669, %v1102
    %1104 = vdwg.mxu0
    %1105 = vmatprep.subr.bf16.mxu0 %v897
    %1106 = vmatpush1.bf16.msra.mxu0 %v896
    %1107 = vmatprep.subr.bf16.mxu0 %v899
    %1108 = vmatpush1.bf16.msra.mxu0 %v898
    %1109 = vmatprep.subr.bf16.mxu0 %v901
    %1110 = vmatpush1.bf16.msra.mxu0 %v900
    %1111 = vmatprep.subr.bf16.mxu0 %v903
    %1112 = vmatpush1.bf16.msra.mxu0 %v902
    %1113 = vmatprep.subr.bf16.mxu0 %v905
    %1114 = vmatpush1.bf16.msra.mxu0 %v904
    %1115 = vmatprep.subr.bf16.mxu0 %v907
    %1116 = vmatpush1.bf16.msra.mxu0 %v906
    %1117 = vmatprep.subr.bf16.mxu0 %v909
    %1118 = vmatpush1.bf16.msra.mxu0 %v908
    %1119 = vmatprep.subr.bf16.mxu0 %v911
    %1120 = vmatpush1.bf16.msra.mxu0 %v910
    %1121 = vmatprep.subr.bf16.mxu0 %v913
    %1122 = vmatpush1.bf16.msra.mxu0 %v912
    %1123 = vmatprep.subr.bf16.mxu0 %v915
    %1124 = vmatpush1.bf16.msra.mxu0 %v914
    %1125 = vmatprep.subr.bf16.mxu0 %v917
    %1126 = vmatpush1.bf16.msra.mxu0 %v916
    %1127 = vmatprep.subr.bf16.mxu0 %v919
    %1128 = vmatpush1.bf16.msra.mxu0 %v918
    %1129 = vmatprep.subr.bf16.mxu0 %v921
    %1130 = vmatpush1.bf16.msra.mxu0 %v920
    %1131 = vmatprep.subr.bf16.mxu0 %v923
    %1132 = vmatpush1.bf16.msra.mxu0 %v922
    %1133 = vmatprep.subr.bf16.mxu0 %v925
    %1134 = vmatpush1.bf16.msra.mxu0 %v924
    %1135 = vmatprep.subr.bf16.mxu0 %v927
    %1136 = vmatpush1.bf16.msra.mxu0 %v926
    %1137 = vmatprep.mubr.bf16.mxu0 %v567
    %1138 = vmatmul.mubr.bf16.gmra.mrb[0].mxu0 %v566
    %v1139 = vpop.f32.mrb[0].mxu0
    %v1140 = vadd.f32 %v1027, %v1139
    %v1141 = vpop.f32.mrb[0].mxu0
    %v1142 = vadd.f32 %v1029, %v1141
    %v1143 = vpop.f32.mrb[0].mxu0
    %v1144 = vadd.f32 %v1031, %v1143
    %v1145 = vpop.f32.mrb[0].mxu0
    %v1146 = vadd.f32 %v1033, %v1145
    %1147 = vmatprep.mubr.bf16.mxu0 %v571
    %1148 = vmatmul.mubr.bf16.gmra.mrb[0].mxu0 %v570
    %v1149 = vpop.f32.mrb[0].mxu0
    %v1150 = vadd.f32 %v1037, %v1149
    %v1151 = vpop.f32.mrb[0].mxu0
    %v1152 = vadd.f32 %v1039, %v1151
    %v1153 = vpop.f32.mrb[0].mxu0
    %v1154 = vadd.f32 %v1041, %v1153
    %v1155 = vpop.f32.mrb[0].mxu0
    %v1156 = vadd.f32 %v1043, %v1155
    %1157 = vmatprep.mubr.bf16.mxu0 %v575
    %1158 = vmatmul.mubr.bf16.gmra.mrb[0].mxu0 %v574
    %v1159 = vpop.f32.mrb[0].mxu0
    %v1160 = vadd.f32 %v1047, %v1159
    %v1161 = vpop.f32.mrb[0].mxu0
    %v1162 = vadd.f32 %v1049, %v1161
    %v1163 = vpop.f32.mrb[0].mxu0
    %v1164 = vadd.f32 %v1051, %v1163
    %v1165 = vpop.f32.mrb[0].mxu0
    %v1166 = vadd.f32 %v1053, %v1165
    %1167 = vmatprep.mubr.bf16.mxu0 %v579
    %1168 = vmatmul.mubr.bf16.gmra.mrb[0].mxu0 %v578
    %v1169 = vpop.f32.mrb[0].mxu0
    %v1170 = vadd.f32 %v1057, %v1169
    %v1171 = vpop.f32.mrb[0].mxu0
    %v1172 = vadd.f32 %v1059, %v1171
    %v1173 = vpop.f32.mrb[0].mxu0
    %v1174 = vadd.f32 %v1061, %v1173
    %v1175 = vpop.f32.mrb[0].mxu0
    %v1176 = vadd.f32 %v1063, %v1175
    %1177 = vmatprep.mubr.bf16.mxu0 %v583
    %1178 = vmatmul.mubr.bf16.gmra.mrb[0].mxu0 %v582
    %v1179 = vpop.f32.mrb[0].mxu0
    %v1180 = vadd.f32 %v1067, %v1179
    %v1181 = vpop.f32.mrb[0].mxu0
    %v1182 = vadd.f32 %v1069, %v1181
    %v1183 = vpop.f32.mrb[0].mxu0
    %v1184 = vadd.f32 %v1071, %v1183
    %v1185 = vpop.f32.mrb[0].mxu0
    %v1186 = vadd.f32 %v1073, %v1185
    %1187 = vmatprep.mubr.bf16.mxu0 %v587
    %1188 = vmatmul.mubr.bf16.gmra.mrb[0].mxu0 %v586
    %v1189 = vpop.f32.mrb[0].mxu0
    %v1190 = vadd.f32 %v1077, %v1189
    %v1191 = vpop.f32.mrb[0].mxu0
    %v1192 = vadd.f32 %v1079, %v1191
    %v1193 = vpop.f32.mrb[0].mxu0
    %v1194 = vadd.f32 %v1081, %v1193
    %v1195 = vpop.f32.mrb[0].mxu0
    %v1196 = vadd.f32 %v1083, %v1195
    %1197 = vmatprep.mubr.bf16.mxu0 %v591
    %1198 = vmatmul.mubr.bf16.gmra.mrb[0].mxu0 %v590
    %v1199 = vpop.f32.mrb[0].mxu0
    %v1200 = vadd.f32 %v1087, %v1199
    %v1201 = vpop.f32.mrb[0].mxu0
    %v1202 = vadd.f32 %v1089, %v1201
    %v1203 = vpop.f32.mrb[0].mxu0
    %v1204 = vadd.f32 %v1091, %v1203
    %v1205 = vpop.f32.mrb[0].mxu0
    %v1206 = vadd.f32 %v1093, %v1205
    %1207 = vmatprep.mubr.bf16.mxu0 %v595
    %1208 = vmatmul.mubr.bf16.gmra.mrb[0].mxu0 %v594
    %v1209 = vpop.f32.mrb[0].mxu0
    %v1210 = vadd.f32 %v1097, %v1209
    %v1211 = vpop.f32.mrb[0].mxu0
    %v1212 = vadd.f32 %v1099, %v1211
    %v1213 = vpop.f32.mrb[0].mxu0
    %v1214 = vadd.f32 %v1101, %v1213
    %v1215 = vpop.f32.mrb[0].mxu0
    %v1216 = vadd.f32 %v1103, %v1215
    %1217 = vdwg.mxu0
    %v1218 = vmul.f32 %v1140, 0.2
    %v1219 = vmul.f32 %v1142, 0.2
    %v1220 = vmul.f32 %v1144, 0.2
    %v1221 = vmul.f32 %v1146, 0.2
    %v1222 = vmul.f32 %v1150, 0.2
    %v1223 = vmul.f32 %v1152, 0.2
    %v1224 = vmul.f32 %v1154, 0.2
    %v1225 = vmul.f32 %v1156, 0.2
    %v1226 = vmul.f32 %v1160, 0.2
    %v1227 = vmul.f32 %v1162, 0.2
    %v1228 = vmul.f32 %v1164, 0.2
    %v1229 = vmul.f32 %v1166, 0.2
    %v1230 = vmul.f32 %v1170, 0.2
    %v1231 = vmul.f32 %v1172, 0.2
    %v1232 = vmul.f32 %v1174, 0.2
    %v1233 = vmul.f32 %v1176, 0.2
    %v1234 = vmul.f32 %v1180, 0.2
    %v1235 = vmul.f32 %v1182, 0.2
    %v1236 = vmul.f32 %v1184, 0.2
    %v1237 = vmul.f32 %v1186, 0.2
    %v1238 = vmul.f32 %v1190, 0.2
    %v1239 = vmul.f32 %v1192, 0.2
    %v1240 = vmul.f32 %v1194, 0.2
    %v1241 = vmul.f32 %v1196, 0.2
    %v1242 = vmul.f32 %v1200, 0.2
    %v1243 = vmul.f32 %v1202, 0.2
    %v1244 = vmul.f32 %v1204, 0.2
    %v1245 = vmul.f32 %v1206, 0.2
    %v1246 = vmul.f32 %v1210, 0.2
    %v1247 = vmul.f32 %v1212, 0.2
    %v1248 = vmul.f32 %v1214, 0.2
    %v1249 = vmul.f32 %v1216, 0.2
    %v1250 = vmax.f32 %v1140, %v1218
    %v1251 = vmax.f32 %v1142, %v1219
    %v1252 = vmax.f32 %v1144, %v1220
    %v1253 = vmax.f32 %v1146, %v1221
    %v1254 = vmax.f32 %v1150, %v1222
    %v1255 = vmax.f32 %v1152, %v1223
    %v1256 = vmax.f32 %v1154, %v1224
    %v1257 = vmax.f32 %v1156, %v1225
    %v1258 = vmax.f32 %v1160, %v1226
    %v1259 = vmax.f32 %v1162, %v1227
    %v1260 = vmax.f32 %v1164, %v1228
    %v1261 = vmax.f32 %v1166, %v1229
    %v1262 = vmax.f32 %v1170, %v1230
    %v1263 = vmax.f32 %v1172, %v1231
    %v1264 = vmax.f32 %v1174, %v1232
    %v1265 = vmax.f32 %v1176, %v1233
    %v1266 = vmax.f32 %v1180, %v1234
    %v1267 = vmax.f32 %v1182, %v1235
    %v1268 = vmax.f32 %v1184, %v1236
    %v1269 = vmax.f32 %v1186, %v1237
    %v1270 = vmax.f32 %v1190, %v1238
    %v1271 = vmax.f32 %v1192, %v1239
    %v1272 = vmax.f32 %v1194, %v1240
    %v1273 = vmax.f32 %v1196, %v1241
    %v1274 = vmax.f32 %v1200, %v1242
    %v1275 = vmax.f32 %v1202, %v1243
    %v1276 = vmax.f32 %v1204, %v1244
    %v1277 = vmax.f32 %v1206, %v1245
    %v1278 = vmax.f32 %v1210, %v1246
    %v1279 = vmax.f32 %v1212, %v1247
    %v1280 = vmax.f32 %v1214, %v1248
    %v1281 = vmax.f32 %v1216, %v1249
    %v1282 = vpack.c.bf16 %v1252, %v1250
    %v1283 = vpack.c.bf16 %v1253, %v1251
    %v1284 = vpack.c.bf16 %v1256, %v1254
    %v1285 = vpack.c.bf16 %v1257, %v1255
    %v1286 = vpack.c.bf16 %v1260, %v1258
    %v1287 = vpack.c.bf16 %v1261, %v1259
    %v1288 = vpack.c.bf16 %v1264, %v1262
    %v1289 = vpack.c.bf16 %v1265, %v1263
    %v1290 = vpack.c.bf16 %v1268, %v1266
    %v1291 = vpack.c.bf16 %v1269, %v1267
    %v1292 = vpack.c.bf16 %v1272, %v1270
    %v1293 = vpack.c.bf16 %v1273, %v1271
    %v1294 = vpack.c.bf16 %v1276, %v1274
    %v1295 = vpack.c.bf16 %v1277, %v1275
    %v1296 = vpack.c.bf16 %v1280, %v1278
    %v1297 = vpack.c.bf16 %v1281, %v1279
    %v1298 = vld [vmem:[%s5] sm:$0xff]
    %v1299 = vld [vmem:[%s5 + $0x8] sm:$0xff]
    %v1302 = vunpack.c.l.b16 %v1298
    %v1303 = vunpack.c.h.b16 %v1298
    %v1304 = vunpack.c.l.b16 %v1299
    %v1305 = vunpack.c.h.b16 %v1299
    %v1306 = vpack.c.b16 %v1304, %v1302
    %v1307 = vpack.c.b16 %v1305, %v1303
    %1310 = vmatprep.subr.bf16.mxu0 %v1283
    %1311 = vmatpush1.bf16.xpose.msra.mxu0 %v1282
    %1312 = vmatprep.subr.bf16.mxu0 %v1285
    %1313 = vmatpush1.bf16.xpose.msra.mxu0 %v1284
    %1314 = vmatprep.subr.bf16.mxu0 %v1287
    %1315 = vmatpush1.bf16.xpose.msra.mxu0 %v1286
    %1316 = vmatprep.subr.bf16.mxu0 %v1289
    %1317 = vmatpush1.bf16.xpose.msra.mxu0 %v1288
    %1318 = vmatprep.subr.bf16.mxu0 %v1291
    %1319 = vmatpush1.bf16.xpose.msra.mxu0 %v1290
    %1320 = vmatprep.subr.bf16.mxu0 %v1293
    %1321 = vmatpush1.bf16.xpose.msra.mxu0 %v1292
    %1322 = vmatprep.subr.bf16.mxu0 %v1295
    %1323 = vmatpush1.bf16.xpose.msra.mxu0 %v1294
    %1324 = vmatprep.subr.bf16.mxu0 %v1297
    %1325 = vmatpush1.bf16.xpose.msra.mxu0 %v1296
    %1326 = vmatprep.subr.bf16.mxu0 0
    %1327 = vmatpush1.bf16.xpose.msra.mxu0 0
    %1328 = vmatprep.subr.bf16.mxu0 0
    %1329 = vmatpush1.bf16.xpose.msra.mxu0 0
    %1330 = vmatprep.subr.bf16.mxu0 0
    %1331 = vmatpush1.bf16.xpose.msra.mxu0 0
    %1332 = vmatprep.subr.bf16.mxu0 0
    %1333 = vmatpush1.bf16.xpose.msra.mxu0 0
    %1334 = vmatprep.subr.bf16.mxu0 0
    %1335 = vmatpush1.bf16.xpose.msra.mxu0 0
    %1336 = vmatprep.subr.bf16.mxu0 0
    %1337 = vmatpush1.bf16.xpose.msra.mxu0 0
    %1338 = vmatprep.subr.bf16.mxu0 0
    %1339 = vmatpush1.bf16.xpose.msra.mxu0 0
    %1340 = vmatprep.subr.bf16.mxu0 0
    %1341 = vmatpush1.bf16.xpose.msra.mxu0 0
    %1342 = vmatprep.mubr.bf16.mxu0 %v1307
    %1343 = vmatmul.mubr.bf16.gmra.mrb[0].mxu0 %v1306
    %v1344 = vpop.f32.mrb[0].mxu0
    %v1345 = vadd.f32 0.0, %v1344
    %v1346 = vpop.f32.mrb[0].mxu0
    %v1347 = vpop.f32.mrb[0].mxu0
    %v1348 = vpop.f32.mrb[0].mxu0
    %1349 = vdwg.mxu0
    %s1350 = sld [smem:[#allocation2]]
    %v1351 = vstv %s1350
    %v1352 = vadd.f32 %v1345, %v1351
    %v1353 = vxor.u32 %v1352, 2147483648
    %v1354 = vmul.f32 %v1353, 1.442695
    %v1355 = vpow.pop %v1354
    %v1356 = vadd.f32 %v1355, 1.0
    %v1357 = vrcp.pop %v1356
    %v1358 = vmul.f32 1.0, %v1357
    %1359 = vst [vmem:[#allocation6] sm:$0x1] %v1358
    // Predicated region
    $region34: #{tpu_custom_call.1} parent=1 // pred_check
      _
    $region35: #{tpu_custom_call.1} parent=1 // pred_check_branch
      %1361 = sbr.rel (0) target = $region37
    $region36: #{tpu_custom_call.1} parent=1 // pred_region
      %s1363 = ssub.s32 16, 16
      %1364 = vsyncadd [#allocation5], %s1363
      %s1366 = sshll.u32 [#allocation6], 4
      %s1367 = int_to_ptr.vmem [resolvable:$true] %s1366
      %1369 = dma.vmem_to_hbm [thread:$0]  %s1367, 16, %s7, [#allocation5]
    $region37: #{tpu_custom_call.1} parent=1 // pred_fallthru
      _
    // Predicated region
    $region38: #{tpu_custom_call.1} parent=1 // pred_check
      _
    $region39: #{tpu_custom_call.1} parent=1 // pred_check_branch
      %1371 = sbr.rel (0) target = $region41
    $region40: #{tpu_custom_call.1} parent=1 // pred_region
      %1372 = dma.done [#allocation5], 16
    $region41: #{tpu_custom_call.1} parent=1 // pred_fallthru
      _
    %1373 = vsyncpa [#allocation4], 1
    %1374 = vsyncpa [#allocation5], 1

</llo_original>
